<compile_context>
chip_gen: v5e
topology: v5e:2x2
jax: 0.10.0
libtpu: 0.0.40
codegen_flags: <defaults>
</compile_context>

<pallas_src>
import numpy as np
import jax
import jax.numpy as jnp
from jax.experimental import pallas as pl
from jax.experimental.pallas import tpu as pltpu


def _round_up(a: int, m: int) -> int:
    return (a + m - 1) // m * m


def _ple_kernel(x_ref, expand_ref, params_ref, o_ref):
    # x_ref:      (tb, F)    batch rows on sublanes, features on lanes
    # expand_ref: (F, tk)    0/1 matrix: feature f -> its flat-bin columns
    # params_ref: (4, tk)    rows = [edge, 1/width, clamp_lo, clamp_hi]
    # o_ref:      (tb, tk)   flattened, lane-dense output tile
    x = x_ref[...].astype(jnp.float32)
    # Replicate x[b, f] into every flat-bin column of feature f using the
    # (otherwise idle) MXU.  0/1 weights + HIGHEST precision -> bit-exact.
    xr = jnp.dot(
        x, expand_ref[...],
        preferred_element_type=jnp.float32,
        precision=jax.lax.Precision.HIGHEST,
    )                                                   # (tb, tk)
    edges = params_ref[0:1, :]
    invw = params_ref[1:2, :]
    lo = params_ref[2:3, :]
    hi = params_ref[3:4, :]
    t = (xr - edges) * invw                             # == (x - edge) / width
    t = jnp.minimum(jnp.maximum(t, lo), hi)
    o_ref[...] = t.astype(o_ref.dtype)


def make_ple_params(bins):
    """Precompute flat encoding parameters from per-feature bin-edge arrays.

    bins: list of 1-D sorted arrays of bin edges (each length >= 2, finite).
    Returns (expand, packed):
      expand (F, K) f32 : 0/1 feature -> flat-bin expansion matrix
      packed (4, K) f32 : rows = [left edge, 1/width, clamp_lo, clamp_hi]
                          (+/-inf bounds where PyTorch does not clamp)
    K = sum(len(b) - 1 for b in bins); no inf padding anywhere, so
    heterogeneous bin counts are handled exactly.
    """
    assert len(bins) > 0, "The list of bins must not be empty"
    counts = []
    for b in bins:
        b = np.asarray(b)
        assert b.ndim == 1 and b.shape[0] >= 2, "each feature needs >= 2 edges"
        assert np.all(np.isfinite(b)), "bin edges must be finite"
        assert np.all(b[:-1] < b[1:]), "bin edges must be sorted"
        counts.append(int(b.shape[0]) - 1)

    F = len(bins)
    K = int(sum(counts))

    expand = np.zeros((F, K), np.float32)
    packed = np.zeros((4, K), np.float32)
    packed[2, :] = -np.inf                  # lo
    packed[3, :] = np.inf                   # hi

    k = 0
    for f, b in enumerate(bins):
        b = np.asarray(b, np.float32)
        c = counts[f]
        for j in range(c):
            expand[f, k] = 1.0
            packed[0, k] = b[j]
            packed[1, k] = np.float32(1.0) / (b[j + 1] - b[j])
            if c > 1:
                if j >= 1:
                    packed[2, k] = 0.0
                if j <= c - 2:
                    packed[3, k] = 1.0
            k += 1
    return jnp.asarray(expand), jnp.asarray(packed)


def _choose_tiles(B, F, K, tb, tk):
    """Pick (batch_tile, k_tile) from an honest VMEM budget.

    Per grid step (f32, lane/sublane-padded sizes):
      x in       : 2 bufs * tb * round128(F)
      expand     : 2 bufs * round8(F) * round128(tk)
      params     : 2 bufs * 8 * round128(tk)        ((4,tk) pads to (8,tk))
      out        : 2 bufs * tb * round128(tk)
      intermed.  : ~2 * tb * round128(tk)  (f32 matmul result + clamp temp)
    """
    # ---- K tile: bounds VMEM independent of K, keeps stores lane-dense ----
    if tk is None:
        tk = K if K <= 2048 else 2048
    tk = min(int(tk), K)
    if tk < K:
        tk = max(128, (tk // 128) * 128)     # partial-K blocks need 128-multiples
    # shrink tk if the double-buffered expand matrix alone gets too big
    while tk > 128 and 2 * _round_up(F, 8) * _round_up(tk, 128) * 4 > (8 << 20):
        tk = max(128, ((tk // 2) // 128) * 128)

    lanes_f = _round_up(F, 128)
    lanes_k = _round_up(tk, 128)
    const_bytes = 4 * (2 * _round_up(F, 8) * lanes_k + 2 * 8 * lanes_k)
    per_row_bytes = 4 * (2 * lanes_f + 2 * lanes_k + 2 * lanes_k)
    budget_bytes = 16 * 1024 * 1024          # headroom under 32 MiB scoped limit

    if tb is None:
        tb = max(8, (budget_bytes - const_bytes) // per_row_bytes)
        # Keep >= ~8 grid steps along batch: lets the BlockSpec pipeline
        # overlap in/out DMA with compute, and gives v7x's second TensorCore
        # parallel work (a single-step grid serializes everything on one TC).
        tb = min(tb, _round_up(pl.cdiv(B, 8), 8))
        tb = min(tb, 1024)
    tb = min(int(tb), B)
    if B >= 8:
        tb = max(8, (tb // 8) * 8)
    else:
        tb = B                               # full-extent block when B < 8
    return tb, tk


def piecewise_linear_encoding(x, params, *, tb=None, tk=None, out_dtype=None):
    """x: (*, n_features) -> (*, total_n_bins) piecewise-linear encoding."""
    expand, packed = params
    F, K = expand.shape
    if x.ndim < 2:
        raise ValueError("The input must have at least two dimensions")
    assert x.shape[-1] == F, "last dim of x must equal number of features"
    if out_dtype is None:
        out_dtype = x.dtype
    lead = x.shape[:-1]
    # No feature padding of x: full-extent (tb, F) block, Mosaic pads in VMEM.
    x2 = x.reshape(-1, F)
    B = x2.shape[0]

    tb, tk = _choose_tiles(B, F, K, tb, tk)
    grid = (pl.cdiv(B, tb), pl.cdiv(K, tk))

    out = pl.pallas_call(
        _ple_kernel,
        out_shape=jax.ShapeDtypeStruct((B, K), out_dtype),
        grid_spec=pltpu.PrefetchScalarGridSpec(
            num_scalar_prefetch=0,
            grid=grid,
            in_specs=[
                pl.BlockSpec((tb, F), lambda i, j: (i, 0)),    # x: batch-tiled
                pl.BlockSpec((F, tk), lambda i, j: (0, j)),    # expand: K-tiled
                pl.BlockSpec((4, tk), lambda i, j: (0, j)),    # packed params
            ],
            out_specs=pl.BlockSpec((tb, tk), lambda i, j: (i, j)),
        ),
        compiler_params=pltpu.CompilerParams(
            dimension_semantics=("parallel", "parallel"),
            vmem_limit_bytes=32 * 1024 * 1024,
        ),
    )(x2, expand, packed)
    return out.reshape(*lead, K)


def _reference_forward(x, bins):
    """Pure-JAX transcription of PiecewiseLinearEncoding.forward (both branches)."""
    x2 = x.reshape(-1, x.shape[-1])
    cols = []
    for f, b in enumerate(bins):
        b = jnp.asarray(b, jnp.float32)
        e, w = b[:-1], b[1:] - b[:-1]
        t = (x2[:, f][:, None] - e[None, :]) / w[None, :]      # (B, count_f)
        c = t.shape[-1]
        if c > 1:
            parts = [jnp.minimum(t[:, :1], 1.0)]
            if c > 2:
                parts.append(jnp.clip(t[:, 1:-1], 0.0, 1.0))
            parts.append(jnp.maximum(t[:, -1:], 0.0))
            t = jnp.concatenate(parts, axis=-1)
        cols.append(t)
    out = jnp.concatenate(cols, axis=-1)
    return out.reshape(*x.shape[:-1], out.shape[-1])


def _exact_match(out, x, params):
    """Bit-exactness guard: kernel output must equal the same f32 math done
    with a plain gather (protects the 0/1 HIGHEST-precision MXU replication
    against a future switch to DEFAULT precision / bf16 inputs)."""
    expand, packed = params
    F, K = expand.shape
    feat = jnp.argmax(expand, axis=0)                  # feature of each flat bin
    x2 = x.reshape(-1, F).astype(jnp.float32)
    t = (x2[:, feat] - packed[0][None, :]) * packed[1][None, :]
    t = jnp.minimum(jnp.maximum(t, packed[2][None, :]), packed[3][None, :])
    return bool(jnp.array_equal(out.reshape(-1, K).astype(jnp.float32), t))


if __name__ == "__main__":
    key = jax.random.PRNGKey(0)
    kx1, kx2 = jax.random.split(key)

    # --- Test 1: equal bin counts (F=16, 8 bins each -> K=128, lane-dense) ---
    B, F, N_EDGES = 1024, 16, 9
    bins1 = [jnp.linspace(-2.0 - 0.1 * f, 2.0 + 0.07 * f, N_EDGES) for f in range(F)]
    params1 = make_ple_params(bins1)
    x1 = jax.random.normal(kx1, (B, F), dtype=jnp.float32)

    out1 = jax.block_until_ready(piecewise_linear_encoding(x1, params1))
    ref1 = _reference_forward(x1, bins1)
    assert out1.shape == (B, F * (N_EDGES - 1))
    assert jnp.allclose(out1, ref1, atol=1e-5, rtol=1e-5)
    assert _exact_match(out1, x1, params1), "MXU replication path is not bit-exact"

    # --- Test 2: heterogeneous bin counts (incl. a single-bin feature) + leading dims ---
    edge_counts = [2, 4, 9, 3, 6]                 # bin counts [1, 3, 8, 2, 5] -> 19 bins
    bins2 = [jnp.linspace(-1.0 - 0.3 * f, 1.5 + 0.2 * f, n)
             for f, n in enumerate(edge_counts)]
    params2 = make_ple_params(bins2)
    x2 = jax.random.normal(kx2, (4, 16, len(edge_counts)), dtype=jnp.float32)

    out2 = jax.block_until_ready(piecewise_linear_encoding(x2, params2))
    ref2 = _reference_forward(x2, bins2)
    assert out2.shape == (4, 16, sum(n - 1 for n in edge_counts))
    assert jnp.allclose(out2, ref2, atol=1e-5, rtol=1e-5)
    assert _exact_match(out2, x2, params2)

    # --- Test 3: bf16 output (halves HBM write traffic on this write-bound kernel) ---
    out1_bf16 = jax.block_until_ready(
        piecewise_linear_encoding(x1, params1, out_dtype=jnp.bfloat16))
    assert out1_bf16.dtype == jnp.bfloat16
    assert jnp.allclose(out1_bf16.astype(jnp.float32), ref1, atol=1e-2, rtol=1e-2)

    print("KERNEL_OK")
</pallas_src>

<mosaic_0001>
module attributes {stable_mosaic.version = 11 : i64} {
  func.func @_ple_kernel(%arg0: i32, %arg1: i32, %arg2: memref<128x16xf32, #tpu.memory_space<vmem>>, %arg3: memref<16x128xf32, #tpu.memory_space<vmem>>, %arg4: memref<4x128xf32, #tpu.memory_space<vmem>>, %arg5: memref<128x128xf32, #tpu.memory_space<vmem>>) attributes {dimension_semantics = [#tpu.dimension_semantics<parallel>, #tpu.dimension_semantics<parallel>], iteration_bounds = array<i64: 8, 1>, scalar_prefetch = 0 : i64, scratch_operands = 0 : i64, tpu.core_type = #tpu.core_type<tc>, window_params = [{transform_indices = @transform_0, window_bounds = array<i64: 128, 16>}, {transform_indices = @transform_1, window_bounds = array<i64: 16, 128>}, {transform_indices = @transform_2, window_bounds = array<i64: 4, 128>}, {transform_indices = @transform_3, window_bounds = array<i64: 128, 128>}]} {
    %c0 = arith.constant 0 : index
    %c0_0 = arith.constant 0 : index
    %0 = vector.load %arg2[%c0, %c0_0] : memref<128x16xf32, #tpu.memory_space<vmem>>, vector<128x16xf32>
    %c0_1 = arith.constant 0 : index
    %c0_2 = arith.constant 0 : index
    %1 = vector.load %arg3[%c0_1, %c0_2] : memref<16x128xf32, #tpu.memory_space<vmem>>, vector<16x128xf32>
    %cst = arith.constant dense<0.000000e+00> : vector<128x128xf32>
    %2 = tpu.matmul %0, %1, %cst {dimension_numbers = #tpu.dot_dimension_numbers<[1], [0], [0], [1], [0, 0, 1, 1], [], []>, precision = #tpu.contract_precision<fp32>} : vector<128x16xf32>, vector<16x128xf32>, vector<128x128xf32> -> vector<128x128xf32>
    %c0_3 = arith.constant 0 : index
    %c0_4 = arith.constant 0 : index
    %3 = vector.load %arg4[%c0_3, %c0_4] : memref<4x128xf32, #tpu.memory_space<vmem>>, vector<1x128xf32>
    %c1 = arith.constant 1 : index
    %c0_5 = arith.constant 0 : index
    %4 = vector.load %arg4[%c1, %c0_5] : memref<4x128xf32, #tpu.memory_space<vmem>>, vector<1x128xf32>
    %c2 = arith.constant 2 : index
    %c0_6 = arith.constant 0 : index
    %5 = vector.load %arg4[%c2, %c0_6] : memref<4x128xf32, #tpu.memory_space<vmem>>, vector<1x128xf32>
    %c3 = arith.constant 3 : index
    %c0_7 = arith.constant 0 : index
    %6 = vector.load %arg4[%c3, %c0_7] : memref<4x128xf32, #tpu.memory_space<vmem>>, vector<1x128xf32>
    %7 = vector.broadcast %3 : vector<1x128xf32> to vector<128x128xf32>
    %8 = arith.subf %2, %7 : vector<128x128xf32>
    %9 = vector.broadcast %4 : vector<1x128xf32> to vector<128x128xf32>
    %10 = arith.mulf %8, %9 : vector<128x128xf32>
    %11 = vector.broadcast %5 : vector<1x128xf32> to vector<128x128xf32>
    %12 = arith.maximumf %10, %11 : vector<128x128xf32>
    %13 = vector.broadcast %6 : vector<1x128xf32> to vector<128x128xf32>
    %14 = arith.minimumf %12, %13 : vector<128x128xf32>
    %c0_8 = arith.constant 0 : index
    %c0_9 = arith.constant 0 : index
    %15 = vector.load %arg5[%c0_8, %c0_9] : memref<128x128xf32, #tpu.memory_space<vmem>>, vector<128x128xf32>
    tpu.vector_store %arg5[%c0_8, %c0_9], %14 {strides = array<i32>} : memref<128x128xf32, #tpu.memory_space<vmem>>, vector<128x128xf32>,
    return
  }
  func.func @transform_0(%arg0: i32, %arg1: i32) -> (i32, i32) {
    %c0_i32 = arith.constant 0 : i32
    %c0_i32_0 = arith.constant 0 : i32
    return %arg0, %c0_i32 : i32, i32
  }
  func.func @transform_1(%arg0: i32, %arg1: i32) -> (i32, i32) {
    %c0_i32 = arith.constant 0 : i32
    %c0_i32_0 = arith.constant 0 : i32
    return %c0_i32, %arg1 : i32, i32
  }
  func.func @transform_2(%arg0: i32, %arg1: i32) -> (i32, i32) {
    %c0_i32 = arith.constant 0 : i32
    %c0_i32_0 = arith.constant 0 : i32
    return %c0_i32, %arg1 : i32, i32
  }
  func.func @transform_3(%arg0: i32, %arg1: i32) -> (i32, i32) {
    %c0_i32 = arith.constant 0 : i32
    return %arg0, %arg1 : i32, i32
  }
}

</mosaic_0001>

<llo_original>
// kernel: tpu_custom_call.1
$region0: #{tpu_custom_call.1}
  #allocation0 [shape = 'u32[]', space=smem, size = 0x4, offset = 0x4, fixed_abs, tag = 'smem constant byte address 0x4 - core index']
  #allocation1 [shape = 'u32[72,128]{1,0:T(1,128)}', space=vmem, size = 0x9000, scoped, tag = 'internal scratch']
  %s0 = inlined_call_operand.vmem [shape: f32[1024,16], index: 0, kind: input, shape index: {}]
  %s1 = inlined_call_operand.vmem [shape: f32[16,128], index: 1, kind: input, shape index: {}]
  %s2 = inlined_call_operand.vmem [shape: f32[4,128], index: 2, kind: input, shape index: {}]
  %s3 = inlined_call_operand.hbm [shape: f32[1024,128], index: 3, kind: output, shape index: {}]
  %s4 = sld [smem:[#allocation0]]
  $region45: #{tpu_custom_call.1} parent=0
    _
  %s6 = ssub.s32 1, %s4
  %s7 = scalar_select 0, %s6, %s4
  $region1: #{tpu_custom_call.1} parent=0
    #allocation2 [shape = 'u8[131072]{0}', space=vmem, size = 0x20000, scoped, tag = 'output window, operand 0']
    #allocation3 [shape = 's32[2]{0}', space=sflag, size = 0x8, scoped, tag = 'scoped memory for tpu_custom_call.1']
    %8 = vsyncpa [#allocation3], 0
    %s9 = scalar_lea.sflag [#allocation3], 1
    %10 = vsyncpa %s9, 0
    loop: start=0, step=1, limit=10
    $region2: #{tpu_custom_call.1} parent=1 // loop_pre_header
      _
    $region3: #{tpu_custom_call.1} parent=1 // loop_header
      %s12 = sphi 0, %s16
      %p13 = scmp.ge.s32.totalorder %s12, 10
      %s19 = sphi 0, %s31
      %s20 = sphi 0, %s27
      %s21 = sphi 0, %s19
      %s22 = sphi 0, %s20
      %s23 = sphi 0, %s21
      %s24 = sphi 0, %s22
      %s34 = sphi 0, %s36
      %s37 = sphi 0, %s34
      %s38 = sphi 0, %s37
      %s54 = sphi 0, %s38
      %s60 = sphi 0, %s62
      %s63 = sphi 0, %s60
      %s64 = sphi 0, %s63
      %s80 = sphi 0, %s64
      %s86 = sphi 0, %s88
      %s89 = sphi 0, %s86
      %s90 = sphi 0, %s89
      %s106 = sphi 0, %s90
      %s114 = sphi 0, %s116
      %s117 = sphi 0, %s114
      %s118 = sphi 0, %s117
      %s134 = sphi 0, %s118
    $region4: #{tpu_custom_call.1} parent=1 // loop_header_branch
      %15 = sbr.rel (%p13) target = $region8
    $region5: #{tpu_custom_call.1} parent=1 // loop_body
      %s17 = ssub.s32 %s12, 1
      %s18 = ssub.s32 %s12, 2
      %s25 = sadd.s32 1, %s20
      %p26 = scmp.ge.s32.totalorder %s25, 1
      %s27 = scalar_select %p26, 0, %s25
      %s28 = sadd.s32 1, %s19
      %s29 = scalar_select %p26, %s28, %s19
      %p30 = scmp.ge.s32.totalorder %s29, 8
      %s31 = scalar_select %p30, 0, %s29
      %s32 = ssub.s32 %s19, %s31
      %p33 = scmp.eq.s32.totalorder %s32, 0
      %s35 = sadd.s32 %s34, 1
      %s36 = scalar_select %p33, %s34, %s35
      %p39 = pneg %p33
      %p40 = scmp.eq.s32.totalorder %s12, 7
      %p41 = por %p39, %p40
      %p42 = scmp.ne.s32.totalorder %s34, %s37
      %p43 = scmp.eq.s32.totalorder %s12, 0
      %p44 = por %p42, %p43
      %p45 = scmp.ne.s32.totalorder %s34, %s37
      %p46 = scmp.eq.s32.totalorder %s17, 7
      %p47 = por %p45, %p46
      %p48 = scmp.ne.s32.totalorder %s37, %s38
      %p49 = scmp.eq.s32.totalorder %s17, 0
      %p50 = por %p48, %p49
      %p51 = scmp.ne.s32.totalorder %s37, %s38
      %p52 = scmp.eq.s32.totalorder %s18, 7
      %p53 = por %p51, %p52
      %p55 = scmp.ne.s32.totalorder %s38, %s54
      %p56 = scmp.eq.s32.totalorder %s18, 0
      %p57 = por %p55, %p56
      %s58 = ssub.s32 %s20, %s27
      %p59 = scmp.eq.s32.totalorder %s58, 0
      %s61 = sadd.s32 %s60, 1
      %s62 = scalar_select %p59, %s60, %s61
      %p65 = pneg %p59
      %p66 = scmp.eq.s32.totalorder %s12, 7
      %p67 = por %p65, %p66
      %p68 = scmp.ne.s32.totalorder %s60, %s63
      %p69 = scmp.eq.s32.totalorder %s12, 0
      %p70 = por %p68, %p69
      %p71 = scmp.ne.s32.totalorder %s60, %s63
      %p72 = scmp.eq.s32.totalorder %s17, 7
      %p73 = por %p71, %p72
      %p74 = scmp.ne.s32.totalorder %s63, %s64
      %p75 = scmp.eq.s32.totalorder %s17, 0
      %p76 = por %p74, %p75
      %p77 = scmp.ne.s32.totalorder %s63, %s64
      %p78 = scmp.eq.s32.totalorder %s18, 7
      %p79 = por %p77, %p78
      %p81 = scmp.ne.s32.totalorder %s64, %s80
      %p82 = scmp.eq.s32.totalorder %s18, 0
      %p83 = por %p81, %p82
      %s84 = ssub.s32 %s20, %s27
      %p85 = scmp.eq.s32.totalorder %s84, 0
      %s87 = sadd.s32 %s86, 1
      %s88 = scalar_select %p85, %s86, %s87
      %p91 = pneg %p85
      %p92 = scmp.eq.s32.totalorder %s12, 7
      %p93 = por %p91, %p92
      %p94 = scmp.ne.s32.totalorder %s86, %s89
      %p95 = scmp.eq.s32.totalorder %s12, 0
      %p96 = por %p94, %p95
      %p97 = scmp.ne.s32.totalorder %s86, %s89
      %p98 = scmp.eq.s32.totalorder %s17, 7
      %p99 = por %p97, %p98
      %p100 = scmp.ne.s32.totalorder %s89, %s90
      %p101 = scmp.eq.s32.totalorder %s17, 0
      %p102 = por %p100, %p101
      %p103 = scmp.ne.s32.totalorder %s89, %s90
      %p104 = scmp.eq.s32.totalorder %s18, 7
      %p105 = por %p103, %p104
      %p107 = scmp.ne.s32.totalorder %s90, %s106
      %p108 = scmp.eq.s32.totalorder %s18, 0
      %p109 = por %p107, %p108
      %s110 = ssub.s32 %s19, %s31
      %s111 = ssub.s32 %s20, %s27
      %s112 = sor.u32 %s110, %s111
      %p113 = scmp.eq.s32.totalorder %s112, 0
      %s115 = sadd.s32 %s114, 1
      %s116 = scalar_select %p113, %s114, %s115
      %p119 = pneg %p113
      %p120 = scmp.eq.s32.totalorder %s12, 7
      %p121 = por %p119, %p120
      %p122 = scmp.ne.s32.totalorder %s114, %s117
      %p123 = scmp.eq.s32.totalorder %s12, 0
      %p124 = por %p122, %p123
      %p125 = scmp.ne.s32.totalorder %s114, %s117
      %p126 = scmp.eq.s32.totalorder %s17, 7
      %p127 = por %p125, %p126
      %p128 = scmp.ne.s32.totalorder %s117, %s118
      %p129 = scmp.eq.s32.totalorder %s17, 0
      %p130 = por %p128, %p129
      %p131 = scmp.ne.s32.totalorder %s117, %s118
      %p132 = scmp.eq.s32.totalorder %s18, 7
      %p133 = por %p131, %p132
      %p135 = scmp.ne.s32.totalorder %s118, %s134
      %p136 = scmp.eq.s32.totalorder %s18, 0
      %p137 = por %p135, %p136
      %p138 = scmp.le.s32.totalorder 1, %s12
      %p139 = scmp.lt.s32.totalorder %s12, 9
      %p140 = pnand %p138, %p139
      %p141 = pneg %p140
      // Predicated region
      $region9: #{tpu_custom_call.1} parent=5 // pred_check
        _
      $region10: #{tpu_custom_call.1} parent=5 // pred_check_branch
        %143 = sbr.rel (%p140) target = $region12
      $region11: #{tpu_custom_call.1} parent=5 // pred_region
        %s144 = ssub.s32 %s12, 1
        // Predicated region
        $region13: #{tpu_custom_call.1} parent=11 // pred_check
          %p145 = pneg %p76
        $region14: #{tpu_custom_call.1} parent=11 // pred_check_branch
          %147 = sbr.rel (%p145) target = $region16
        $region15: #{tpu_custom_call.1} parent=11 // pred_region
          %p148 = scmp.lt.s32.totalorder %s22, 0
          %s149 = scalar_select %p148, %s22, 0
          %s150 = smul.addr %s149, 8
          %s151 = scalar_lea.vmem %s1, %s150
        $region16: #{tpu_custom_call.1} parent=11 // pred_fallthru
          _
        // Predicated region
        $region17: #{tpu_custom_call.1} parent=11 // pred_check
          %p152 = pneg %p102
        $region18: #{tpu_custom_call.1} parent=11 // pred_check_branch
          %154 = sbr.rel (%p152) target = $region20
        $region19: #{tpu_custom_call.1} parent=11 // pred_region
          %p155 = scmp.lt.s32.totalorder %s22, 0
          %s156 = scalar_select %p155, %s22, 0
          %s157 = smul.addr %s156, 4
          %s158 = scalar_lea.vmem %s2, %s157
        $region20: #{tpu_custom_call.1} parent=11 // pred_fallthru
          _
      $region12: #{tpu_custom_call.1} parent=5 // pred_fallthru
        _
      %p159 = scmp.lt.s32.totalorder %s12, 8
      // Predicated region
      $region21: #{tpu_custom_call.1} parent=5 // pred_check
        %p160 = pneg %p159
      $region22: #{tpu_custom_call.1} parent=5 // pred_check_branch
        %162 = sbr.rel (%p160) target = $region24
      $region23: #{tpu_custom_call.1} parent=5 // pred_region
        // Predicated region
        $region25: #{tpu_custom_call.1} parent=23 // pred_check
          %p163 = pneg %p44
        $region26: #{tpu_custom_call.1} parent=23 // pred_check_branch
          %165 = sbr.rel (%p163) target = $region28
        $region27: #{tpu_custom_call.1} parent=23 // pred_region
          %s166 = smul.u32 16, %s19
          %p167 = scmp.lt.s32.totalorder %s166, 127
          %s168 = scalar_select %p167, %s166, 127
          %s169 = smul.addr %s168, 8
          %s170 = scalar_lea.vmem %s0, %s169
          %s171 = smul.u32 16, %s19
        $region28: #{tpu_custom_call.1} parent=23 // pred_fallthru
          _
      $region24: #{tpu_custom_call.1} parent=5 // pred_fallthru
        _
      %p172 = scmp.le.s32.totalorder 1, %s12
      %p173 = scmp.lt.s32.totalorder %s12, 9
      %p174 = pnand %p172, %p173
      %p175 = pneg %p174
      // Predicated region
      $region29: #{tpu_custom_call.1} parent=5 // pred_check
        _
      $region30: #{tpu_custom_call.1} parent=5 // pred_check_branch
        %177 = sbr.rel (%p174) target = $region32
      $region31: #{tpu_custom_call.1} parent=5 // pred_region
        %s178 = ssub.s32 %s12, 1
        %s179 = smul.u32 16, %s21
        %p180 = scmp.lt.s32.totalorder %s179, 127
        %s181 = scalar_select %p180, %s179, 127
        %s182 = smul.addr %s181, 8
        %s183 = scalar_lea.vmem %s0, %s182
        %p184 = pneg %p50
        %p185 = pneg %p47
        %p186 = scmp.lt.s32.totalorder %s22, 0
        %s187 = scalar_select %p186, %s22, 0
        %s188 = smul.addr %s187, 8
        %s189 = scalar_lea.vmem %s1, %s188
        %p190 = pneg %p76
        %p191 = pneg %p73
        %p192 = scmp.lt.s32.totalorder %s22, 0
        %s193 = scalar_select %p192, %s22, 0
        %s194 = smul.addr %s193, 4
        %s195 = scalar_lea.vmem %s2, %s194
        %p196 = pneg %p102
        %p197 = pneg %p99
        %p198 = pneg %p130
        %p199 = pneg %p127
        %s200 = sand.u32 %s117, 1
        %s201 = scalar_lea.sflag [#allocation3], %s200
        %s202 = sand.u32 %s117, 1
        %s203 = smul.addr %s202, 128
        %s204 = scalar_lea.vmem [#allocation2], %s203
        %s205 = smul.u32 16, %s21
        %p206 = scmp.lt.s32.totalorder %s205, 127
        %s207 = scalar_select %p206, %s205, 127
        %s208 = smul.addr %s207, 8
        %s209 = scalar_lea.vmem %s0, %s208
        %s210 = smul.u32 16, %s21
        %p211 = scmp.lt.s32.totalorder %s22, 0
        %s212 = scalar_select %p211, %s22, 0
        %s213 = smul.addr %s212, 8
        %s214 = scalar_lea.vmem %s1, %s213
        %p215 = scmp.lt.s32.totalorder %s22, 0
        %s216 = scalar_select %p215, %s22, 0
        %s217 = smul.addr %s216, 4
        %s218 = scalar_lea.vmem %s2, %s217
        %s219 = smul.u32 16, %s21
        %v220 = vld [vmem:[%s209] sm:$0xff]
        %v221 = vld [vmem:[%s209 + $0x8] sm:$0xff]
        %v222 = vld [vmem:[%s209 + $0x10] sm:$0xff]
        %v223 = vld [vmem:[%s209 + $0x18] sm:$0xff]
        %v224 = vld [vmem:[%s209 + $0x20] sm:$0xff]
        %v225 = vld [vmem:[%s209 + $0x28] sm:$0xff]
        %v226 = vld [vmem:[%s209 + $0x30] sm:$0xff]
        %v227 = vld [vmem:[%s209 + $0x38] sm:$0xff]
        %v228 = vld [vmem:[%s209 + $0x40] sm:$0xff]
        %v229 = vld [vmem:[%s209 + $0x48] sm:$0xff]
        %v230 = vld [vmem:[%s209 + $0x50] sm:$0xff]
        %v231 = vld [vmem:[%s209 + $0x58] sm:$0xff]
        %v232 = vld [vmem:[%s209 + $0x60] sm:$0xff]
        %v233 = vld [vmem:[%s209 + $0x68] sm:$0xff]
        %v234 = vld [vmem:[%s209 + $0x70] sm:$0xff]
        %v235 = vld [vmem:[%s209 + $0x78] sm:$0xff]
        %v236 = vld [vmem:[%s214] sm:$0xff]
        %v237 = vld [vmem:[%s214 + $0x8] sm:$0xff]
        %vm238 = vcmask 130048
        %v240 = vsel %vm238, %v220, 0
        %v243 = vsel %vm238, %v221, 0
        %v246 = vsel %vm238, %v222, 0
        %v249 = vsel %vm238, %v223, 0
        %v252 = vsel %vm238, %v224, 0
        %v255 = vsel %vm238, %v225, 0
        %v258 = vsel %vm238, %v226, 0
        %v261 = vsel %vm238, %v227, 0
        %v264 = vsel %vm238, %v228, 0
        %v267 = vsel %vm238, %v229, 0
        %v270 = vsel %vm238, %v230, 0
        %v273 = vsel %vm238, %v231, 0
        %v276 = vsel %vm238, %v232, 0
        %v279 = vsel %vm238, %v233, 0
        %v282 = vsel %vm238, %v234, 0
        %v285 = vsel %vm238, %v235, 0
        %287 = vmatpush.msra.mxu0 0.0
        %288 = vmatpush.msra.mxu0 0.0
        %289 = vmatpush.msra.mxu0 0.0
        %290 = vmatpush.msra.mxu0 0.0
        %291 = vmatpush.msra.mxu0 0.0
        %292 = vmatpush.msra.mxu0 0.0
        %293 = vmatpush.msra.mxu0 0.0
        %294 = vmatpush.msra.mxu0 0.0
        %295 = vmatpush.msra.mxu0 0.0
        %296 = vmatpush.msra.mxu0 0.0
        %297 = vmatpush.msra.mxu0 0.0
        %298 = vmatpush.msra.mxu0 0.0
        %299 = vmatpush.msra.mxu0 0.0
        %300 = vmatpush.msra.mxu0 0.0
        %v301 = vand.u32 %v237, 4294901760
        %302 = vmatpush.msra.mxu0 %v301
        %v303 = vand.u32 %v236, 4294901760
        %304 = vmatpush.msra.mxu0 %v303
        %v305 = vand.u32 %v240, 4294901760
        %v306 = vsub.f32 %v240, %v305
        %v307 = vand.u32 %v306, 4294901760
        %v308 = vsub.f32 %v306, %v307
        %v309 = vand.u32 %v308, 4294901760
        %310 = vmatmul.f32.gmra.mxu0 %v309
        %v311 = vpop.f32.mrf.mxu0
        %v312 = vadd.f32 0.0, %v311
        %v313 = vand.u32 %v243, 4294901760
        %v314 = vsub.f32 %v243, %v313
        %v315 = vand.u32 %v314, 4294901760
        %v316 = vsub.f32 %v314, %v315
        %v317 = vand.u32 %v316, 4294901760
        %318 = vmatmul.f32.gmra.mxu0 %v317
        %v319 = vpop.f32.mrf.mxu0
        %v320 = vadd.f32 0.0, %v319
        %v321 = vand.u32 %v246, 4294901760
        %v322 = vsub.f32 %v246, %v321
        %v323 = vand.u32 %v322, 4294901760
        %v324 = vsub.f32 %v322, %v323
        %v325 = vand.u32 %v324, 4294901760
        %326 = vmatmul.f32.gmra.mxu0 %v325
        %v327 = vpop.f32.mrf.mxu0
        %v328 = vadd.f32 0.0, %v327
        %v329 = vand.u32 %v249, 4294901760
        %v330 = vsub.f32 %v249, %v329
        %v331 = vand.u32 %v330, 4294901760
        %v332 = vsub.f32 %v330, %v331
        %v333 = vand.u32 %v332, 4294901760
        %334 = vmatmul.f32.gmra.mxu0 %v333
        %v335 = vpop.f32.mrf.mxu0
        %v336 = vadd.f32 0.0, %v335
        %v337 = vand.u32 %v252, 4294901760
        %v338 = vsub.f32 %v252, %v337
        %v339 = vand.u32 %v338, 4294901760
        %v340 = vsub.f32 %v338, %v339
        %v341 = vand.u32 %v340, 4294901760
        %342 = vmatmul.f32.gmra.mxu0 %v341
        %v343 = vpop.f32.mrf.mxu0
        %v344 = vadd.f32 0.0, %v343
        %v345 = vand.u32 %v255, 4294901760
        %v346 = vsub.f32 %v255, %v345
        %v347 = vand.u32 %v346, 4294901760
        %v348 = vsub.f32 %v346, %v347
        %v349 = vand.u32 %v348, 4294901760
        %350 = vmatmul.f32.gmra.mxu0 %v349
        %v351 = vpop.f32.mrf.mxu0
        %v352 = vadd.f32 0.0, %v351
        %v353 = vand.u32 %v258, 4294901760
        %v354 = vsub.f32 %v258, %v353
        %v355 = vand.u32 %v354, 4294901760
        %v356 = vsub.f32 %v354, %v355
        %v357 = vand.u32 %v356, 4294901760
        %358 = vmatmul.f32.gmra.mxu0 %v357
        %v359 = vpop.f32.mrf.mxu0
        %v360 = vadd.f32 0.0, %v359
        %v361 = vand.u32 %v261, 4294901760
        %v362 = vsub.f32 %v261, %v361
        %v363 = vand.u32 %v362, 4294901760
        %v364 = vsub.f32 %v362, %v363
        %v365 = vand.u32 %v364, 4294901760
        %366 = vmatmul.f32.gmra.mxu0 %v365
        %v367 = vpop.f32.mrf.mxu0
        %v368 = vadd.f32 0.0, %v367
        %v369 = vand.u32 %v264, 4294901760
        %v370 = vsub.f32 %v264, %v369
        %v371 = vand.u32 %v370, 4294901760
        %v372 = vsub.f32 %v370, %v371
        %v373 = vand.u32 %v372, 4294901760
        %374 = vmatmul.f32.gmra.mxu0 %v373
        %v375 = vpop.f32.mrf.mxu0
        %v376 = vadd.f32 0.0, %v375
        %v377 = vand.u32 %v267, 4294901760
        %v378 = vsub.f32 %v267, %v377
        %v379 = vand.u32 %v378, 4294901760
        %v380 = vsub.f32 %v378, %v379
        %v381 = vand.u32 %v380, 4294901760
        %382 = vmatmul.f32.gmra.mxu0 %v381
        %v383 = vpop.f32.mrf.mxu0
        %v384 = vadd.f32 0.0, %v383
        %v385 = vand.u32 %v270, 4294901760
        %v386 = vsub.f32 %v270, %v385
        %v387 = vand.u32 %v386, 4294901760
        %v388 = vsub.f32 %v386, %v387
        %v389 = vand.u32 %v388, 4294901760
        %390 = vmatmul.f32.gmra.mxu0 %v389
        %v391 = vpop.f32.mrf.mxu0
        %v392 = vadd.f32 0.0, %v391
        %v393 = vand.u32 %v273, 4294901760
        %v394 = vsub.f32 %v273, %v393
        %v395 = vand.u32 %v394, 4294901760
        %v396 = vsub.f32 %v394, %v395
        %v397 = vand.u32 %v396, 4294901760
        %398 = vmatmul.f32.gmra.mxu0 %v397
        %v399 = vpop.f32.mrf.mxu0
        %v400 = vadd.f32 0.0, %v399
        %v401 = vand.u32 %v276, 4294901760
        %v402 = vsub.f32 %v276, %v401
        %v403 = vand.u32 %v402, 4294901760
        %v404 = vsub.f32 %v402, %v403
        %v405 = vand.u32 %v404, 4294901760
        %406 = vmatmul.f32.gmra.mxu0 %v405
        %v407 = vpop.f32.mrf.mxu0
        %v408 = vadd.f32 0.0, %v407
        %v409 = vand.u32 %v279, 4294901760
        %v410 = vsub.f32 %v279, %v409
        %v411 = vand.u32 %v410, 4294901760
        %v412 = vsub.f32 %v410, %v411
        %v413 = vand.u32 %v412, 4294901760
        %414 = vmatmul.f32.gmra.mxu0 %v413
        %v415 = vpop.f32.mrf.mxu0
        %v416 = vadd.f32 0.0, %v415
        %v417 = vand.u32 %v282, 4294901760
        %v418 = vsub.f32 %v282, %v417
        %v419 = vand.u32 %v418, 4294901760
        %v420 = vsub.f32 %v418, %v419
        %v421 = vand.u32 %v420, 4294901760
        %422 = vmatmul.f32.gmra.mxu0 %v421
        %v423 = vpop.f32.mrf.mxu0
        %v424 = vadd.f32 0.0, %v423
        %v425 = vand.u32 %v285, 4294901760
        %v426 = vsub.f32 %v285, %v425
        %v427 = vand.u32 %v426, 4294901760
        %v428 = vsub.f32 %v426, %v427
        %v429 = vand.u32 %v428, 4294901760
        %430 = vmatmul.f32.gmra.mxu0 %v429
        %v431 = vpop.f32.mrf.mxu0
        %v432 = vadd.f32 0.0, %v431
        %433 = vdwg.mxu0
        %434 = vmatpush.msra.mxu0 0.0
        %435 = vmatpush.msra.mxu0 0.0
        %436 = vmatpush.msra.mxu0 0.0
        %437 = vmatpush.msra.mxu0 0.0
        %438 = vmatpush.msra.mxu0 0.0
        %439 = vmatpush.msra.mxu0 0.0
        %440 = vmatpush.msra.mxu0 0.0
        %441 = vmatpush.msra.mxu0 0.0
        %442 = vmatpush.msra.mxu0 0.0
        %443 = vmatpush.msra.mxu0 0.0
        %444 = vmatpush.msra.mxu0 0.0
        %445 = vmatpush.msra.mxu0 0.0
        %446 = vmatpush.msra.mxu0 0.0
        %447 = vmatpush.msra.mxu0 0.0
        %v448 = vand.u32 %v237, 4294901760
        %v449 = vsub.f32 %v237, %v448
        %v450 = vand.u32 %v449, 4294901760
        %v451 = vsub.f32 %v449, %v450
        %v452 = vand.u32 %v451, 4294901760
        %453 = vmatpush.msra.mxu0 %v452
        %v454 = vand.u32 %v236, 4294901760
        %v455 = vsub.f32 %v236, %v454
        %v456 = vand.u32 %v455, 4294901760
        %v457 = vsub.f32 %v455, %v456
        %v458 = vand.u32 %v457, 4294901760
        %459 = vmatpush.msra.mxu0 %v458
        %v460 = vand.u32 %v240, 4294901760
        %461 = vmatmul.f32.gmra.mxu0 %v460
        %v462 = vpop.f32.mrf.mxu0
        %v463 = vadd.f32 %v312, %v462
        %v464 = vand.u32 %v243, 4294901760
        %465 = vmatmul.f32.gmra.mxu0 %v464
        %v466 = vpop.f32.mrf.mxu0
        %v467 = vadd.f32 %v320, %v466
        %v468 = vand.u32 %v246, 4294901760
        %469 = vmatmul.f32.gmra.mxu0 %v468
        %v470 = vpop.f32.mrf.mxu0
        %v471 = vadd.f32 %v328, %v470
        %v472 = vand.u32 %v249, 4294901760
        %473 = vmatmul.f32.gmra.mxu0 %v472
        %v474 = vpop.f32.mrf.mxu0
        %v475 = vadd.f32 %v336, %v474
        %v476 = vand.u32 %v252, 4294901760
        %477 = vmatmul.f32.gmra.mxu0 %v476
        %v478 = vpop.f32.mrf.mxu0
        %v479 = vadd.f32 %v344, %v478
        %v480 = vand.u32 %v255, 4294901760
        %481 = vmatmul.f32.gmra.mxu0 %v480
        %v482 = vpop.f32.mrf.mxu0
        %v483 = vadd.f32 %v352, %v482
        %v484 = vand.u32 %v258, 4294901760
        %485 = vmatmul.f32.gmra.mxu0 %v484
        %v486 = vpop.f32.mrf.mxu0
        %v487 = vadd.f32 %v360, %v486
        %v488 = vand.u32 %v261, 4294901760
        %489 = vmatmul.f32.gmra.mxu0 %v488
        %v490 = vpop.f32.mrf.mxu0
        %v491 = vadd.f32 %v368, %v490
        %v492 = vand.u32 %v264, 4294901760
        %493 = vmatmul.f32.gmra.mxu0 %v492
        %v494 = vpop.f32.mrf.mxu0
        %v495 = vadd.f32 %v376, %v494
        %v496 = vand.u32 %v267, 4294901760
        %497 = vmatmul.f32.gmra.mxu0 %v496
        %v498 = vpop.f32.mrf.mxu0
        %v499 = vadd.f32 %v384, %v498
        %v500 = vand.u32 %v270, 4294901760
        %501 = vmatmul.f32.gmra.mxu0 %v500
        %v502 = vpop.f32.mrf.mxu0
        %v503 = vadd.f32 %v392, %v502
        %v504 = vand.u32 %v273, 4294901760
        %505 = vmatmul.f32.gmra.mxu0 %v504
        %v506 = vpop.f32.mrf.mxu0
        %v507 = vadd.f32 %v400, %v506
        %v508 = vand.u32 %v276, 4294901760
        %509 = vmatmul.f32.gmra.mxu0 %v508
        %v510 = vpop.f32.mrf.mxu0
        %v511 = vadd.f32 %v408, %v510
        %v512 = vand.u32 %v279, 4294901760
        %513 = vmatmul.f32.gmra.mxu0 %v512
        %v514 = vpop.f32.mrf.mxu0
        %v515 = vadd.f32 %v416, %v514
        %v516 = vand.u32 %v282, 4294901760
        %517 = vmatmul.f32.gmra.mxu0 %v516
        %v518 = vpop.f32.mrf.mxu0
        %v519 = vadd.f32 %v424, %v518
        %v520 = vand.u32 %v285, 4294901760
        %521 = vmatmul.f32.gmra.mxu0 %v520
        %v522 = vpop.f32.mrf.mxu0
        %v523 = vadd.f32 %v432, %v522
        %524 = vdwg.mxu0
        %525 = vmatpush.msra.mxu0 0.0
        %526 = vmatpush.msra.mxu0 0.0
        %527 = vmatpush.msra.mxu0 0.0
        %528 = vmatpush.msra.mxu0 0.0
        %529 = vmatpush.msra.mxu0 0.0
        %530 = vmatpush.msra.mxu0 0.0
        %531 = vmatpush.msra.mxu0 0.0
        %532 = vmatpush.msra.mxu0 0.0
        %533 = vmatpush.msra.mxu0 0.0
        %534 = vmatpush.msra.mxu0 0.0
        %535 = vmatpush.msra.mxu0 0.0
        %536 = vmatpush.msra.mxu0 0.0
        %537 = vmatpush.msra.mxu0 0.0
        %538 = vmatpush.msra.mxu0 0.0
        %v539 = vand.u32 %v237, 4294901760
        %v540 = vsub.f32 %v237, %v539
        %541 = vmatpush.msra.mxu0 %v540
        %v542 = vand.u32 %v236, 4294901760
        %v543 = vsub.f32 %v236, %v542
        %544 = vmatpush.msra.mxu0 %v543
        %v545 = vand.u32 %v240, 4294901760
        %v546 = vsub.f32 %v240, %v545
        %547 = vmatmul.f32.gmra.mxu0 %v546
        %v548 = vpop.f32.mrf.mxu0
        %v549 = vadd.f32 %v463, %v548
        %v550 = vand.u32 %v243, 4294901760
        %v551 = vsub.f32 %v243, %v550
        %552 = vmatmul.f32.gmra.mxu0 %v551
        %v553 = vpop.f32.mrf.mxu0
        %v554 = vadd.f32 %v467, %v553
        %v555 = vand.u32 %v246, 4294901760
        %v556 = vsub.f32 %v246, %v555
        %557 = vmatmul.f32.gmra.mxu0 %v556
        %v558 = vpop.f32.mrf.mxu0
        %v559 = vadd.f32 %v471, %v558
        %v560 = vand.u32 %v249, 4294901760
        %v561 = vsub.f32 %v249, %v560
        %562 = vmatmul.f32.gmra.mxu0 %v561
        %v563 = vpop.f32.mrf.mxu0
        %v564 = vadd.f32 %v475, %v563
        %v565 = vand.u32 %v252, 4294901760
        %v566 = vsub.f32 %v252, %v565
        %567 = vmatmul.f32.gmra.mxu0 %v566
        %v568 = vpop.f32.mrf.mxu0
        %v569 = vadd.f32 %v479, %v568
        %v570 = vand.u32 %v255, 4294901760
        %v571 = vsub.f32 %v255, %v570
        %572 = vmatmul.f32.gmra.mxu0 %v571
        %v573 = vpop.f32.mrf.mxu0
        %v574 = vadd.f32 %v483, %v573
        %v575 = vand.u32 %v258, 4294901760
        %v576 = vsub.f32 %v258, %v575
        %577 = vmatmul.f32.gmra.mxu0 %v576
        %v578 = vpop.f32.mrf.mxu0
        %v579 = vadd.f32 %v487, %v578
        %v580 = vand.u32 %v261, 4294901760
        %v581 = vsub.f32 %v261, %v580
        %582 = vmatmul.f32.gmra.mxu0 %v581
        %v583 = vpop.f32.mrf.mxu0
        %v584 = vadd.f32 %v491, %v583
        %v585 = vand.u32 %v264, 4294901760
        %v586 = vsub.f32 %v264, %v585
        %587 = vmatmul.f32.gmra.mxu0 %v586
        %v588 = vpop.f32.mrf.mxu0
        %v589 = vadd.f32 %v495, %v588
        %v590 = vand.u32 %v267, 4294901760
        %v591 = vsub.f32 %v267, %v590
        %592 = vmatmul.f32.gmra.mxu0 %v591
        %v593 = vpop.f32.mrf.mxu0
        %v594 = vadd.f32 %v499, %v593
        %v595 = vand.u32 %v270, 4294901760
        %v596 = vsub.f32 %v270, %v595
        %597 = vmatmul.f32.gmra.mxu0 %v596
        %v598 = vpop.f32.mrf.mxu0
        %v599 = vadd.f32 %v503, %v598
        %v600 = vand.u32 %v273, 4294901760
        %v601 = vsub.f32 %v273, %v600
        %602 = vmatmul.f32.gmra.mxu0 %v601
        %v603 = vpop.f32.mrf.mxu0
        %v604 = vadd.f32 %v507, %v603
        %v605 = vand.u32 %v276, 4294901760
        %v606 = vsub.f32 %v276, %v605
        %607 = vmatmul.f32.gmra.mxu0 %v606
        %v608 = vpop.f32.mrf.mxu0
        %v609 = vadd.f32 %v511, %v608
        %v610 = vand.u32 %v279, 4294901760
        %v611 = vsub.f32 %v279, %v610
        %612 = vmatmul.f32.gmra.mxu0 %v611
        %v613 = vpop.f32.mrf.mxu0
        %v614 = vadd.f32 %v515, %v613
        %v615 = vand.u32 %v282, 4294901760
        %v616 = vsub.f32 %v282, %v615
        %617 = vmatmul.f32.gmra.mxu0 %v616
        %v618 = vpop.f32.mrf.mxu0
        %v619 = vadd.f32 %v519, %v618
        %v620 = vand.u32 %v285, 4294901760
        %v621 = vsub.f32 %v285, %v620
        %622 = vmatmul.f32.gmra.mxu0 %v621
        %v623 = vpop.f32.mrf.mxu0
        %v624 = vadd.f32 %v523, %v623
        %625 = vdwg.mxu0
        %626 = vmatpush.msra.mxu0 0.0
        %627 = vmatpush.msra.mxu0 0.0
        %628 = vmatpush.msra.mxu0 0.0
        %629 = vmatpush.msra.mxu0 0.0
        %630 = vmatpush.msra.mxu0 0.0
        %631 = vmatpush.msra.mxu0 0.0
        %632 = vmatpush.msra.mxu0 0.0
        %633 = vmatpush.msra.mxu0 0.0
        %634 = vmatpush.msra.mxu0 0.0
        %635 = vmatpush.msra.mxu0 0.0
        %636 = vmatpush.msra.mxu0 0.0
        %637 = vmatpush.msra.mxu0 0.0
        %638 = vmatpush.msra.mxu0 0.0
        %639 = vmatpush.msra.mxu0 0.0
        %v640 = vand.u32 %v237, 4294901760
        %641 = vmatpush.msra.mxu0 %v640
        %v642 = vand.u32 %v236, 4294901760
        %643 = vmatpush.msra.mxu0 %v642
        %v644 = vand.u32 %v240, 4294901760
        %v645 = vsub.f32 %v240, %v644
        %v646 = vand.u32 %v645, 4294901760
        %647 = vmatmul.f32.gmra.mxu0 %v646
        %v648 = vpop.f32.mrf.mxu0
        %v649 = vadd.f32 %v549, %v648
        %v650 = vand.u32 %v243, 4294901760
        %v651 = vsub.f32 %v243, %v650
        %v652 = vand.u32 %v651, 4294901760
        %653 = vmatmul.f32.gmra.mxu0 %v652
        %v654 = vpop.f32.mrf.mxu0
        %v655 = vadd.f32 %v554, %v654
        %v656 = vand.u32 %v246, 4294901760
        %v657 = vsub.f32 %v246, %v656
        %v658 = vand.u32 %v657, 4294901760
        %659 = vmatmul.f32.gmra.mxu0 %v658
        %v660 = vpop.f32.mrf.mxu0
        %v661 = vadd.f32 %v559, %v660
        %v662 = vand.u32 %v249, 4294901760
        %v663 = vsub.f32 %v249, %v662
        %v664 = vand.u32 %v663, 4294901760
        %665 = vmatmul.f32.gmra.mxu0 %v664
        %v666 = vpop.f32.mrf.mxu0
        %v667 = vadd.f32 %v564, %v666
        %v668 = vand.u32 %v252, 4294901760
        %v669 = vsub.f32 %v252, %v668
        %v670 = vand.u32 %v669, 4294901760
        %671 = vmatmul.f32.gmra.mxu0 %v670
        %v672 = vpop.f32.mrf.mxu0
        %v673 = vadd.f32 %v569, %v672
        %v674 = vand.u32 %v255, 4294901760
        %v675 = vsub.f32 %v255, %v674
        %v676 = vand.u32 %v675, 4294901760
        %677 = vmatmul.f32.gmra.mxu0 %v676
        %v678 = vpop.f32.mrf.mxu0
        %v679 = vadd.f32 %v574, %v678
        %v680 = vand.u32 %v258, 4294901760
        %v681 = vsub.f32 %v258, %v680
        %v682 = vand.u32 %v681, 4294901760
        %683 = vmatmul.f32.gmra.mxu0 %v682
        %v684 = vpop.f32.mrf.mxu0
        %v685 = vadd.f32 %v579, %v684
        %v686 = vand.u32 %v261, 4294901760
        %v687 = vsub.f32 %v261, %v686
        %v688 = vand.u32 %v687, 4294901760
        %689 = vmatmul.f32.gmra.mxu0 %v688
        %v690 = vpop.f32.mrf.mxu0
        %v691 = vadd.f32 %v584, %v690
        %v692 = vand.u32 %v264, 4294901760
        %v693 = vsub.f32 %v264, %v692
        %v694 = vand.u32 %v693, 4294901760
        %695 = vmatmul.f32.gmra.mxu0 %v694
        %v696 = vpop.f32.mrf.mxu0
        %v697 = vadd.f32 %v589, %v696
        %v698 = vand.u32 %v267, 4294901760
        %v699 = vsub.f32 %v267, %v698
        %v700 = vand.u32 %v699, 4294901760
        %701 = vmatmul.f32.gmra.mxu0 %v700
        %v702 = vpop.f32.mrf.mxu0
        %v703 = vadd.f32 %v594, %v702
        %v704 = vand.u32 %v270, 4294901760
        %v705 = vsub.f32 %v270, %v704
        %v706 = vand.u32 %v705, 4294901760
        %707 = vmatmul.f32.gmra.mxu0 %v706
        %v708 = vpop.f32.mrf.mxu0
        %v709 = vadd.f32 %v599, %v708
        %v710 = vand.u32 %v273, 4294901760
        %v711 = vsub.f32 %v273, %v710
        %v712 = vand.u32 %v711, 4294901760
        %713 = vmatmul.f32.gmra.mxu0 %v712
        %v714 = vpop.f32.mrf.mxu0
        %v715 = vadd.f32 %v604, %v714
        %v716 = vand.u32 %v276, 4294901760
        %v717 = vsub.f32 %v276, %v716
        %v718 = vand.u32 %v717, 4294901760
        %719 = vmatmul.f32.gmra.mxu0 %v718
        %v720 = vpop.f32.mrf.mxu0
        %v721 = vadd.f32 %v609, %v720
        %v722 = vand.u32 %v279, 4294901760
        %v723 = vsub.f32 %v279, %v722
        %v724 = vand.u32 %v723, 4294901760
        %725 = vmatmul.f32.gmra.mxu0 %v724
        %v726 = vpop.f32.mrf.mxu0
        %v727 = vadd.f32 %v614, %v726
        %v728 = vand.u32 %v282, 4294901760
        %v729 = vsub.f32 %v282, %v728
        %v730 = vand.u32 %v729, 4294901760
        %731 = vmatmul.f32.gmra.mxu0 %v730
        %v732 = vpop.f32.mrf.mxu0
        %v733 = vadd.f32 %v619, %v732
        %v734 = vand.u32 %v285, 4294901760
        %v735 = vsub.f32 %v285, %v734
        %v736 = vand.u32 %v735, 4294901760
        %737 = vmatmul.f32.gmra.mxu0 %v736
        %v738 = vpop.f32.mrf.mxu0
        %v739 = vadd.f32 %v624, %v738
        %740 = vdwg.mxu0
        %741 = vmatpush.msra.mxu0 0.0
        %742 = vmatpush.msra.mxu0 0.0
        %743 = vmatpush.msra.mxu0 0.0
        %744 = vmatpush.msra.mxu0 0.0
        %745 = vmatpush.msra.mxu0 0.0
        %746 = vmatpush.msra.mxu0 0.0
        %747 = vmatpush.msra.mxu0 0.0
        %748 = vmatpush.msra.mxu0 0.0
        %749 = vmatpush.msra.mxu0 0.0
        %750 = vmatpush.msra.mxu0 0.0
        %751 = vmatpush.msra.mxu0 0.0
        %752 = vmatpush.msra.mxu0 0.0
        %753 = vmatpush.msra.mxu0 0.0
        %754 = vmatpush.msra.mxu0 0.0
        %v755 = vand.u32 %v237, 4294901760
        %v756 = vsub.f32 %v237, %v755
        %v757 = vand.u32 %v756, 4294901760
        %758 = vmatpush.msra.mxu0 %v757
        %v759 = vand.u32 %v236, 4294901760
        %v760 = vsub.f32 %v236, %v759
        %v761 = vand.u32 %v760, 4294901760
        %762 = vmatpush.msra.mxu0 %v761
        %v763 = vand.u32 %v240, 4294901760
        %764 = vmatmul.f32.gmra.mxu0 %v763
        %v765 = vpop.f32.mrf.mxu0
        %v766 = vadd.f32 %v649, %v765
        %v767 = vand.u32 %v243, 4294901760
        %768 = vmatmul.f32.gmra.mxu0 %v767
        %v769 = vpop.f32.mrf.mxu0
        %v770 = vadd.f32 %v655, %v769
        %v771 = vand.u32 %v246, 4294901760
        %772 = vmatmul.f32.gmra.mxu0 %v771
        %v773 = vpop.f32.mrf.mxu0
        %v774 = vadd.f32 %v661, %v773
        %v775 = vand.u32 %v249, 4294901760
        %776 = vmatmul.f32.gmra.mxu0 %v775
        %v777 = vpop.f32.mrf.mxu0
        %v778 = vadd.f32 %v667, %v777
        %v779 = vand.u32 %v252, 4294901760
        %780 = vmatmul.f32.gmra.mxu0 %v779
        %v781 = vpop.f32.mrf.mxu0
        %v782 = vadd.f32 %v673, %v781
        %v783 = vand.u32 %v255, 4294901760
        %784 = vmatmul.f32.gmra.mxu0 %v783
        %v785 = vpop.f32.mrf.mxu0
        %v786 = vadd.f32 %v679, %v785
        %v787 = vand.u32 %v258, 4294901760
        %788 = vmatmul.f32.gmra.mxu0 %v787
        %v789 = vpop.f32.mrf.mxu0
        %v790 = vadd.f32 %v685, %v789
        %v791 = vand.u32 %v261, 4294901760
        %792 = vmatmul.f32.gmra.mxu0 %v791
        %v793 = vpop.f32.mrf.mxu0
        %v794 = vadd.f32 %v691, %v793
        %v795 = vand.u32 %v264, 4294901760
        %796 = vmatmul.f32.gmra.mxu0 %v795
        %v797 = vpop.f32.mrf.mxu0
        %v798 = vadd.f32 %v697, %v797
        %v799 = vand.u32 %v267, 4294901760
        %800 = vmatmul.f32.gmra.mxu0 %v799
        %v801 = vpop.f32.mrf.mxu0
        %v802 = vadd.f32 %v703, %v801
        %v803 = vand.u32 %v270, 4294901760
        %804 = vmatmul.f32.gmra.mxu0 %v803
        %v805 = vpop.f32.mrf.mxu0
        %v806 = vadd.f32 %v709, %v805
        %v807 = vand.u32 %v273, 4294901760
        %808 = vmatmul.f32.gmra.mxu0 %v807
        %v809 = vpop.f32.mrf.mxu0
        %v810 = vadd.f32 %v715, %v809
        %v811 = vand.u32 %v276, 4294901760
        %812 = vmatmul.f32.gmra.mxu0 %v811
        %v813 = vpop.f32.mrf.mxu0
        %v814 = vadd.f32 %v721, %v813
        %v815 = vand.u32 %v279, 4294901760
        %816 = vmatmul.f32.gmra.mxu0 %v815
        %v817 = vpop.f32.mrf.mxu0
        %v818 = vadd.f32 %v727, %v817
        %v819 = vand.u32 %v282, 4294901760
        %820 = vmatmul.f32.gmra.mxu0 %v819
        %v821 = vpop.f32.mrf.mxu0
        %v822 = vadd.f32 %v733, %v821
        %v823 = vand.u32 %v285, 4294901760
        %824 = vmatmul.f32.gmra.mxu0 %v823
        %v825 = vpop.f32.mrf.mxu0
        %v826 = vadd.f32 %v739, %v825
        %827 = vdwg.mxu0
        %828 = vmatpush.msra.mxu0 0.0
        %829 = vmatpush.msra.mxu0 0.0
        %830 = vmatpush.msra.mxu0 0.0
        %831 = vmatpush.msra.mxu0 0.0
        %832 = vmatpush.msra.mxu0 0.0
        %833 = vmatpush.msra.mxu0 0.0
        %834 = vmatpush.msra.mxu0 0.0
        %835 = vmatpush.msra.mxu0 0.0
        %836 = vmatpush.msra.mxu0 0.0
        %837 = vmatpush.msra.mxu0 0.0
        %838 = vmatpush.msra.mxu0 0.0
        %839 = vmatpush.msra.mxu0 0.0
        %840 = vmatpush.msra.mxu0 0.0
        %841 = vmatpush.msra.mxu0 0.0
        %v842 = vand.u32 %v237, 4294901760
        %843 = vmatpush.msra.mxu0 %v842
        %v844 = vand.u32 %v236, 4294901760
        %845 = vmatpush.msra.mxu0 %v844
        %v846 = vand.u32 %v240, 4294901760
        %847 = vmatmul.f32.gmra.mxu0 %v846
        %v848 = vpop.f32.mrf.mxu0
        %v849 = vadd.f32 %v766, %v848
        %v850 = vand.u32 %v243, 4294901760
        %851 = vmatmul.f32.gmra.mxu0 %v850
        %v852 = vpop.f32.mrf.mxu0
        %v853 = vadd.f32 %v770, %v852
        %v854 = vand.u32 %v246, 4294901760
        %855 = vmatmul.f32.gmra.mxu0 %v854
        %v856 = vpop.f32.mrf.mxu0
        %v857 = vadd.f32 %v774, %v856
        %v858 = vand.u32 %v249, 4294901760
        %859 = vmatmul.f32.gmra.mxu0 %v858
        %v860 = vpop.f32.mrf.mxu0
        %v861 = vadd.f32 %v778, %v860
        %v862 = vand.u32 %v252, 4294901760
        %863 = vmatmul.f32.gmra.mxu0 %v862
        %v864 = vpop.f32.mrf.mxu0
        %v865 = vadd.f32 %v782, %v864
        %v866 = vand.u32 %v255, 4294901760
        %867 = vmatmul.f32.gmra.mxu0 %v866
        %v868 = vpop.f32.mrf.mxu0
        %v869 = vadd.f32 %v786, %v868
        %v870 = vand.u32 %v258, 4294901760
        %871 = vmatmul.f32.gmra.mxu0 %v870
        %v872 = vpop.f32.mrf.mxu0
        %v873 = vadd.f32 %v790, %v872
        %v874 = vand.u32 %v261, 4294901760
        %875 = vmatmul.f32.gmra.mxu0 %v874
        %v876 = vpop.f32.mrf.mxu0
        %v877 = vadd.f32 %v794, %v876
        %v878 = vand.u32 %v264, 4294901760
        %879 = vmatmul.f32.gmra.mxu0 %v878
        %v880 = vpop.f32.mrf.mxu0
        %v881 = vadd.f32 %v798, %v880
        %v882 = vand.u32 %v267, 4294901760
        %883 = vmatmul.f32.gmra.mxu0 %v882
        %v884 = vpop.f32.mrf.mxu0
        %v885 = vadd.f32 %v802, %v884
        %v886 = vand.u32 %v270, 4294901760
        %887 = vmatmul.f32.gmra.mxu0 %v886
        %v888 = vpop.f32.mrf.mxu0
        %v889 = vadd.f32 %v806, %v888
        %v890 = vand.u32 %v273, 4294901760
        %891 = vmatmul.f32.gmra.mxu0 %v890
        %v892 = vpop.f32.mrf.mxu0
        %v893 = vadd.f32 %v810, %v892
        %v894 = vand.u32 %v276, 4294901760
        %895 = vmatmul.f32.gmra.mxu0 %v894
        %v896 = vpop.f32.mrf.mxu0
        %v897 = vadd.f32 %v814, %v896
        %v898 = vand.u32 %v279, 4294901760
        %899 = vmatmul.f32.gmra.mxu0 %v898
        %v900 = vpop.f32.mrf.mxu0
        %v901 = vadd.f32 %v818, %v900
        %v902 = vand.u32 %v282, 4294901760
        %903 = vmatmul.f32.gmra.mxu0 %v902
        %v904 = vpop.f32.mrf.mxu0
        %v905 = vadd.f32 %v822, %v904
        %v906 = vand.u32 %v285, 4294901760
        %907 = vmatmul.f32.gmra.mxu0 %v906
        %v908 = vpop.f32.mrf.mxu0
        %v909 = vadd.f32 %v826, %v908
        %910 = vdwg.mxu0
        %v911 = vld [vmem:[%s218] sm:$0x1]
        %v912 = vld [vmem:[%s218 + $0x1] sm:$0x1]
        %v913 = vld [vmem:[%s218 + $0x2] sm:$0x1]
        %v914 = vld [vmem:[%s218 + $0x3] sm:$0x1]
        %v915 = vperm.slane %v911, 0
        %v916 = vsub.f32 %v849, %v915
        %v917 = vsub.f32 %v853, %v915
        %v918 = vsub.f32 %v857, %v915
        %v919 = vsub.f32 %v861, %v915
        %v920 = vsub.f32 %v865, %v915
        %v921 = vsub.f32 %v869, %v915
        %v922 = vsub.f32 %v873, %v915
        %v923 = vsub.f32 %v877, %v915
        %v924 = vsub.f32 %v881, %v915
        %v925 = vsub.f32 %v885, %v915
        %v926 = vsub.f32 %v889, %v915
        %v927 = vsub.f32 %v893, %v915
        %v928 = vsub.f32 %v897, %v915
        %v929 = vsub.f32 %v901, %v915
        %v930 = vsub.f32 %v905, %v915
        %v931 = vsub.f32 %v909, %v915
        %v932 = vperm.slane %v912, 0
        %v933 = vmul.f32 %v916, %v932
        %v934 = vmul.f32 %v917, %v932
        %v935 = vmul.f32 %v918, %v932
        %v936 = vmul.f32 %v919, %v932
        %v937 = vmul.f32 %v920, %v932
        %v938 = vmul.f32 %v921, %v932
        %v939 = vmul.f32 %v922, %v932
        %v940 = vmul.f32 %v923, %v932
        %v941 = vmul.f32 %v924, %v932
        %v942 = vmul.f32 %v925, %v932
        %v943 = vmul.f32 %v926, %v932
        %v944 = vmul.f32 %v927, %v932
        %v945 = vmul.f32 %v928, %v932
        %v946 = vmul.f32 %v929, %v932
        %v947 = vmul.f32 %v930, %v932
        %v948 = vmul.f32 %v931, %v932
        %v949 = vperm.slane %v913, 0
        %v950 = vmax.f32 %v933, %v949
        %v951 = vmax.f32 %v934, %v949
        %v952 = vmax.f32 %v935, %v949
        %v953 = vmax.f32 %v936, %v949
        %v954 = vmax.f32 %v937, %v949
        %v955 = vmax.f32 %v938, %v949
        %v956 = vmax.f32 %v939, %v949
        %v957 = vmax.f32 %v940, %v949
        %v958 = vmax.f32 %v941, %v949
        %v959 = vmax.f32 %v942, %v949
        %v960 = vmax.f32 %v943, %v949
        %v961 = vmax.f32 %v944, %v949
        %v962 = vmax.f32 %v945, %v949
        %v963 = vmax.f32 %v946, %v949
        %v964 = vmax.f32 %v947, %v949
        %v965 = vmax.f32 %v948, %v949
        %v966 = vperm.slane %v914, 0
        %v967 = vmin.f32 %v950, %v966
        %v968 = vmin.f32 %v951, %v966
        %v969 = vmin.f32 %v952, %v966
        %v970 = vmin.f32 %v953, %v966
        %v971 = vmin.f32 %v954, %v966
        %v972 = vmin.f32 %v955, %v966
        %v973 = vmin.f32 %v956, %v966
        %v974 = vmin.f32 %v957, %v966
        %v975 = vmin.f32 %v958, %v966
        %v976 = vmin.f32 %v959, %v966
        %v977 = vmin.f32 %v960, %v966
        %v978 = vmin.f32 %v961, %v966
        %v979 = vmin.f32 %v962, %v966
        %v980 = vmin.f32 %v963, %v966
        %v981 = vmin.f32 %v964, %v966
        %v982 = vmin.f32 %v965, %v966
        %983 = vst [vmem:[%s204] sm:$0xff] %v967
        %984 = vst [vmem:[%s204 + $0x8] sm:$0xff] %v968
        %985 = vst [vmem:[%s204 + $0x10] sm:$0xff] %v969
        %986 = vst [vmem:[%s204 + $0x18] sm:$0xff] %v970
        %987 = vst [vmem:[%s204 + $0x20] sm:$0xff] %v971
        %988 = vst [vmem:[%s204 + $0x28] sm:$0xff] %v972
        %989 = vst [vmem:[%s204 + $0x30] sm:$0xff] %v973
        %990 = vst [vmem:[%s204 + $0x38] sm:$0xff] %v974
        %991 = vst [vmem:[%s204 + $0x40] sm:$0xff] %v975
        %992 = vst [vmem:[%s204 + $0x48] sm:$0xff] %v976
        %993 = vst [vmem:[%s204 + $0x50] sm:$0xff] %v977
        %994 = vst [vmem:[%s204 + $0x58] sm:$0xff] %v978
        %995 = vst [vmem:[%s204 + $0x60] sm:$0xff] %v979
        %996 = vst [vmem:[%s204 + $0x68] sm:$0xff] %v980
        %997 = vst [vmem:[%s204 + $0x70] sm:$0xff] %v981
        %998 = vst [vmem:[%s204 + $0x78] sm:$0xff] %v982
        %s999 = sand.u32 %s117, 1
        %s1000 = scalar_lea.sflag [#allocation3], %s999
        %s1001 = sand.u32 %s117, 1
        %s1002 = smul.addr %s1001, 128
        %s1003 = scalar_lea.vmem [#allocation2], %s1002
        // Predicated region
        $region33: #{tpu_custom_call.1} parent=31 // pred_check
          %p1004 = pneg %p127
        $region34: #{tpu_custom_call.1} parent=31 // pred_check_branch
          %1006 = sbr.rel (%p1004) target = $region36
        $region35: #{tpu_custom_call.1} parent=31 // pred_region
          %s1007 = smul.u32 16, %s21
          %1009 = vsyncadd %s1000, 0
          %s1010 = sadd.s32 %s22, %s1007
          %s1011 = smul.addr %s1010, 8
          %s1012 = scalar_lea.hbm %s3, %s1011
          %s1013 = sshll.u32 %s1003, 4
          %s1014 = int_to_ptr.vmem [resolvable:$true] %s1013
          %s1015 = sshll.u32 %s1012, 4
          %s1016 = int_to_ptr.hbm [resolvable:$true] %s1015
          %1021 = dma.vmem_to_hbm [thread:$0]  %s1014, 2048, %s1016, %s1000, 128, 128, 8
        $region36: #{tpu_custom_call.1} parent=31 // pred_fallthru
          _
      $region32: #{tpu_custom_call.1} parent=5 // pred_fallthru
        _
      %p1022 = scmp.le.s32.totalorder 2, %s12
      // Predicated region
      $region37: #{tpu_custom_call.1} parent=5 // pred_check
        %p1023 = pneg %p1022
      $region38: #{tpu_custom_call.1} parent=5 // pred_check_branch
        %1025 = sbr.rel (%p1023) target = $region40
      $region39: #{tpu_custom_call.1} parent=5 // pred_region
        %s1026 = ssub.s32 %s12, 2
        // Predicated region
        $region41: #{tpu_custom_call.1} parent=39 // pred_check
          %p1027 = pneg %p133
        $region42: #{tpu_custom_call.1} parent=39 // pred_check_branch
          %1029 = sbr.rel (%p1027) target = $region44
        $region43: #{tpu_custom_call.1} parent=39 // pred_region
          %s1030 = sand.u32 %s118, 1
          %s1031 = scalar_lea.sflag [#allocation3], %s1030
          %s1032 = sand.u32 %s118, 1
          %s1033 = smul.addr %s1032, 128
          %s1034 = scalar_lea.vmem [#allocation2], %s1033
          %1036 = dma.done %s1031, 2048
        $region44: #{tpu_custom_call.1} parent=39 // pred_fallthru
          _
      $region40: #{tpu_custom_call.1} parent=5 // pred_fallthru
        _
    $region6: #{tpu_custom_call.1} parent=1 // loop_footer
      %s16 = sadd.s32 1, %s12
    $region7: #{tpu_custom_call.1} parent=1 // loop_footer_branch
      %11 = sbr.rel target = $region3
    $region8: #{tpu_custom_call.1} parent=1 // loop_exit
      _
    %1037 = vsyncpa [#allocation3], 1
    %s1038 = scalar_lea.sflag [#allocation3], 1
    %1039 = vsyncpa %s1038, 1

</llo_original>
